<compile_context>
chip_gen: v6e
topology: v6e:2x2x1
jax: 0.10.0
libtpu: 0.0.40
codegen_flags: <defaults>
</compile_context>

<pallas_src>
import functools

import jax
import jax.numpy as jnp
from jax.experimental import pallas as pl
from jax.experimental.pallas import tpu as pltpu


def _round_up(x, m):
    return (x + m - 1) // m * m


def _vmem_config():
    """(vmem_limit_bytes, working-set budget) sized for the local TPU gen."""
    phys = 64 * 1024 * 1024
    try:
        phys = int(pltpu.get_tpu_info().vmem_capacity_bytes)
    except Exception:
        pass
    if phys >= 128 * 1024 * 1024:                # v5e / v6e: 128 MiB per core
        return 96 * 1024 * 1024, 56 * 1024 * 1024
    return 32 * 1024 * 1024, 20 * 1024 * 1024    # v7x (64 MiB) or unknown


VMEM_LIMIT, VMEM_BUDGET = _vmem_config()


# ----------------------------- Pallas kernels ------------------------------


def matmul_stats_kernel(p_ref, w_ref, y_ref, psum_ref, pssq_ref, acc_ref):
    """K-tiled conv matmul; emits bf16 y + per-M-tile partial channel stats."""
    k = pl.program_id(1)

    @pl.when(k == 0)
    def _():
        acc_ref[...] = jnp.zeros_like(acc_ref)

    acc_ref[...] += jnp.dot(p_ref[...], w_ref[...],
                            preferred_element_type=jnp.float32)

    @pl.when(k == pl.num_programs(1) - 1)
    def _():
        y = acc_ref[...]                                    # exact f32 result
        s = jnp.sum(y, axis=0, keepdims=True)               # (1, C_pad)
        q = jnp.sum(y * y, axis=0, keepdims=True)           # (1, C_pad)
        psum_ref[...] = jnp.broadcast_to(s, psum_ref.shape)  # (1, 8, C_pad)
        pssq_ref[...] = jnp.broadcast_to(q, pssq_ref.shape)
        y_ref[...] = y.astype(y_ref.dtype)                   # bf16 to HBM


def matmul_lrelu_kernel(p_ref, w_ref, o_ref, acc_ref, *, neg_slope):
    """K-tiled conv matmul + fused LeakyReLU (layer 0: no BatchNorm)."""
    k = pl.program_id(1)

    @pl.when(k == 0)
    def _():
        acc_ref[...] = jnp.zeros_like(acc_ref)

    acc_ref[...] += jnp.dot(p_ref[...], w_ref[...],
                            preferred_element_type=jnp.float32)

    @pl.when(k == pl.num_programs(1) - 1)
    def _():
        y = acc_ref[...]
        y = jnp.maximum(y, 0.0) + neg_slope * jnp.minimum(y, 0.0)
        o_ref[...] = y.astype(o_ref.dtype)


def bn_lrelu_kernel(y_ref, scale_ref, shift_ref, o_ref, *, neg_slope):
    """Tiled BatchNorm (precomputed per-channel scale/shift) + LeakyReLU."""
    y = y_ref[...].astype(jnp.float32) * scale_ref[...] + shift_ref[...]
    y = jnp.maximum(y, 0.0) + neg_slope * jnp.minimum(y, 0.0)
    o_ref[...] = y.astype(o_ref.dtype)


def linear_sigmoid_kernel(x_ref, w_ref, o_ref):
    """Linear(no bias) as a VPU reduction, then sigmoid (EUP exp/recip)."""
    z = jnp.sum(x_ref[...].astype(jnp.float32) * w_ref[...],
                axis=-1, keepdims=True)
    o_ref[...] = 1.0 / (1.0 + jnp.exp(-z))


# ----------------------------- tile selection -------------------------------


_TM_CANDS = (512, 256, 128)
_TK_CANDS = (2048, 1024, 512, 256, 128)


def _choose_tiles(M, K, C_pad, tm_target, tk_target):
    """Pick MXU/layout-friendly (tm, tk) that fit the VMEM working-set budget."""
    m_cap = _round_up(max(M, 1), 128)
    k_cap = _round_up(max(K, 1), 128)

    def fits(tm, tk):
        patch = 2 * tm * tk * 2           # bf16 patch tile, double-buffered
        weight = 2 * tk * C_pad * 2       # bf16 weight tile, double-buffered
        yout = 2 * tm * C_pad * 2         # bf16 y tile, double-buffered
        stats = 2 * 2 * 8 * C_pad * 4     # partial-stat tiles
        acc = tm * C_pad * 4              # f32 accumulator scratch
        return patch + weight + yout + stats + acc <= VMEM_BUDGET

    for tm in _TM_CANDS:
        if tm > tm_target:
            continue
        tm_e = min(tm, m_cap)
        for tk in _TK_CANDS:
            if tk > tk_target:
                continue
            tk_e = min(tk, k_cap)
            if fits(tm_e, tk_e):
                return tm_e, tk_e
    return min(128, m_cap), min(128, k_cap)


def _choose_bn_tile(M_pad, C_pad):
    """Independent (larger) M tile for the mem-bound BN+LeakyReLU pass."""
    for c in (1024, 512, 256, 128):
        if M_pad % c == 0:
            need = 2 * c * C_pad * 2 * 2 + 4 * C_pad * 4   # bf16 in+out, x2 buf
            if need <= VMEM_BUDGET:
                return c
    return 128


# ------------------------------ pallas_call glue ----------------------------


def conv_matmul_stats(patches, w2d, tm, tk):
    M_pad, K_pad = patches.shape
    C_pad = w2d.shape[1]
    nm, nk = M_pad // tm, K_pad // tk
    y, psum, pssq = pl.pallas_call(
        matmul_stats_kernel,
        out_shape=(jax.ShapeDtypeStruct((M_pad, C_pad), jnp.bfloat16),
                   jax.ShapeDtypeStruct((nm, 8, C_pad), jnp.float32),
                   jax.ShapeDtypeStruct((nm, 8, C_pad), jnp.float32)),
        grid=(nm, nk),
        in_specs=[pl.BlockSpec((tm, tk), lambda i, k: (i, k)),
                  pl.BlockSpec((tk, C_pad), lambda i, k: (k, 0))],
        out_specs=(pl.BlockSpec((tm, C_pad), lambda i, k: (i, 0)),
                   pl.BlockSpec((1, 8, C_pad), lambda i, k: (i, 0, 0)),
                   pl.BlockSpec((1, 8, C_pad), lambda i, k: (i, 0, 0))),
        scratch_shapes=[pltpu.VMEM((tm, C_pad), jnp.float32)],
        compiler_params=pltpu.CompilerParams(
            dimension_semantics=("parallel", "arbitrary"),
            vmem_limit_bytes=VMEM_LIMIT),
    )(patches, w2d)
    # rows within a (8, C_pad) group are identical copies of the tile partial
    ssum = jnp.sum(psum[:, 0, :], axis=0)
    ssq = jnp.sum(pssq[:, 0, :], axis=0)
    return y, ssum, ssq


def conv_matmul_lrelu(patches, w2d, tm, tk, neg_slope=0.01):
    M_pad, K_pad = patches.shape
    C_pad = w2d.shape[1]
    nm, nk = M_pad // tm, K_pad // tk
    return pl.pallas_call(
        functools.partial(matmul_lrelu_kernel, neg_slope=neg_slope),
        out_shape=jax.ShapeDtypeStruct((M_pad, C_pad), jnp.bfloat16),
        grid=(nm, nk),
        in_specs=[pl.BlockSpec((tm, tk), lambda i, k: (i, k)),
                  pl.BlockSpec((tk, C_pad), lambda i, k: (k, 0))],
        out_specs=pl.BlockSpec((tm, C_pad), lambda i, k: (i, 0)),
        scratch_shapes=[pltpu.VMEM((tm, C_pad), jnp.float32)],
        compiler_params=pltpu.CompilerParams(
            dimension_semantics=("parallel", "arbitrary"),
            vmem_limit_bytes=VMEM_LIMIT),
    )(patches, w2d)


def bn_lrelu(y, scale, shift, neg_slope=0.01):
    M_pad, C_pad = y.shape
    tmb = _choose_bn_tile(M_pad, C_pad)
    return pl.pallas_call(
        functools.partial(bn_lrelu_kernel, neg_slope=neg_slope),
        out_shape=jax.ShapeDtypeStruct((M_pad, C_pad), jnp.bfloat16),
        grid=(M_pad // tmb,),
        in_specs=[pl.BlockSpec((tmb, C_pad), lambda i: (i, 0)),
                  pl.BlockSpec((1, C_pad), lambda i: (0, 0)),
                  pl.BlockSpec((1, C_pad), lambda i: (0, 0))],
        out_specs=pl.BlockSpec((tmb, C_pad), lambda i: (i, 0)),
        compiler_params=pltpu.CompilerParams(
            dimension_semantics=("parallel",),
            vmem_limit_bytes=VMEM_LIMIT),
    )(y, scale.astype(jnp.float32), shift.astype(jnp.float32))


def linear_sigmoid(x, w):
    N, F = x.shape
    return pl.pallas_call(
        linear_sigmoid_kernel,
        out_shape=jax.ShapeDtypeStruct((N, 1), jnp.float32),
        in_specs=[pl.BlockSpec((N, F), lambda: (0, 0)),
                  pl.BlockSpec((1, F), lambda: (0, 0))],
        out_specs=pl.BlockSpec((N, 1), lambda: (0, 0)),
        compiler_params=pltpu.CompilerParams(vmem_limit_bytes=VMEM_LIMIT),
    )(x, w.astype(jnp.float32))


# ------------------------------- JAX glue ----------------------------------


def im2col_nhwc(x, c_real, k=4, stride=2, pad=1):
    """NHWC -> (N*H_out*W_out, k*k*C) patches, feature order (kh, kw, c)."""
    N, H, W, _ = x.shape
    x = x[..., :c_real]                          # drop lane padding of channels
    H_out = (H + 2 * pad - k) // stride + 1
    W_out = (W + 2 * pad - k) // stride + 1
    xp = jnp.pad(x, ((0, 0), (pad, pad), (pad, pad), (0, 0)))
    cols = []
    for kh in range(k):
        for kw in range(k):
            cols.append(xp[:, kh:kh + stride * H_out:stride,
                           kw:kw + stride * W_out:stride, :])
    patches = jnp.stack(cols, axis=3)            # (N, H_out, W_out, k*k, C)
    patches = patches.reshape(N * H_out * W_out, k * k * c_real)
    return patches, H_out, W_out


def init_discriminator_params(key, img_size, img_channels, hidden_channels):
    n_layers = len(hidden_channels)
    assert img_size % (2 ** n_layers) == 0
    final_size = img_size // (2 ** n_layers)
    params = {"conv": [], "final_size": final_size}
    in_ch = img_channels
    for i, out_ch in enumerate(hidden_channels):
        key, kw, kg, kb = jax.random.split(key, 4)
        w = 0.02 * jax.random.normal(kw, (out_ch, in_ch, 4, 4), jnp.float32)
        gamma = 1.0 + 0.01 * jax.random.normal(kg, (out_ch,), jnp.float32)
        beta = 0.01 * jax.random.normal(kb, (out_ch,), jnp.float32)
        params["conv"].append(
            {"w": w, "gamma": gamma, "beta": beta, "bn": (i != 0)})
        in_ch = out_ch
    key, kl = jax.random.split(key)
    F = final_size ** 2 * hidden_channels[-1]
    params["linear_w"] = 0.02 * jax.random.normal(kl, (1, F), jnp.float32)
    return params


def discriminator_forward(params, x_nchw, *, tm_target=512, tk_target=2048,
                          eps=1e-5):
    # One NCHW -> NHWC conversion at the network boundary; bf16 activations.
    x = jnp.transpose(x_nchw.astype(jnp.float32), (0, 2, 3, 1))
    x = x.astype(jnp.bfloat16)
    c_real = x.shape[-1]

    for layer in params["conv"]:
        w = layer["w"]                           # (C_out, C_in, 4, 4) PyTorch layout
        c_out = w.shape[0]
        N = x.shape[0]

        patches, H_out, W_out = im2col_nhwc(x, c_real)
        M, K = patches.shape
        C_pad = _round_up(c_out, 128)            # lane-dense output stores
        tm, tk = _choose_tiles(M, K, C_pad, tm_target, tk_target)
        M_pad = _round_up(M, tm)
        K_pad = _round_up(K, tk)

        patches = jnp.pad(patches, ((0, M_pad - M), (0, K_pad - K)))
        # weight flattened in (kh, kw, c_in) order to match the patch features
        w2d = jnp.transpose(w, (2, 3, 1, 0)).reshape(K, c_out)
        w2d = jnp.pad(w2d, ((0, K_pad - K), (0, C_pad - c_out)))
        w2d = w2d.astype(jnp.bfloat16)

        if layer["bn"]:
            # pass A: K-tiled matmul + exact per-M-tile batch statistics
            y, ssum, ssq = conv_matmul_stats(patches, w2d, tm, tk)
            mean = (ssum / M).reshape(1, C_pad)              # true M (pad rows are 0)
            var = jnp.maximum(ssq.reshape(1, C_pad) / M - mean * mean, 0.0)
            inv = jax.lax.rsqrt(var + eps)
            gamma = jnp.pad(layer["gamma"], (0, C_pad - c_out)).reshape(1, C_pad)
            beta = jnp.pad(layer["beta"], (0, C_pad - c_out)).reshape(1, C_pad)
            scale = gamma * inv
            shift = beta - mean * scale
            # pass B: tiled normalize + LeakyReLU (bf16 in, bf16 out)
            act = bn_lrelu(y, scale, shift)
        else:
            # layer 0: LeakyReLU fused into the matmul pass
            act = conv_matmul_lrelu(patches, w2d, tm, tk)

        x = act[:M].reshape(N, H_out, W_out, C_pad)
        c_real = c_out

    # Linear (no bias) + Sigmoid head. Activations are NHWC with padded
    # channels, so permute the PyTorch (c, h, w)-ordered weight to (h, w, c)
    # and pad the channel axis — this preserves the module's flatten order.
    N, fs, _, C_pad = x.shape
    flat = x.reshape(N, fs * fs * C_pad)
    wl = params["linear_w"].reshape(c_real, fs, fs)
    wl = jnp.transpose(wl, (1, 2, 0))
    wl = jnp.pad(wl, ((0, 0), (0, 0), (0, C_pad - c_real)))
    wl = wl.reshape(1, fs * fs * C_pad)
    return linear_sigmoid(flat, wl)


if __name__ == "__main__":
    # small, module-consistent shapes: img_size=16, img_channels=4,
    # hidden_channels=[8, 16, 32] -> final_size = 16 // 8 = 2
    img_size, img_channels = 16, 4
    hidden_channels = [8, 16, 32]
    batch = 4

    key = jax.random.PRNGKey(0)
    key, kx = jax.random.split(key)
    x = jax.random.normal(kx, (batch, img_channels, img_size, img_size),
                          jnp.float32)
    params = init_discriminator_params(key, img_size, img_channels,
                                       hidden_channels)

    out = jax.block_until_ready(discriminator_forward(params, x))
    assert out.shape == (batch, 1)
    assert bool(jnp.all(jnp.isfinite(out)))
    assert bool(jnp.all((out >= 0.0) & (out <= 1.0)))

    # Force small tiles to exercise the multi-M-tile (parallel axis, per-tile
    # partial BN stats) and multi-K-tile (accumulator scratch) paths and check
    # against the default-tiling result.
    out_tiled = jax.block_until_ready(
        discriminator_forward(params, x, tm_target=128, tk_target=128))
    assert bool(jnp.allclose(out, out_tiled, atol=1e-2))

    print("KERNEL_OK")
</pallas_src>

<mosaic_0001>
module attributes {stable_mosaic.version = 11 : i64} {
  func.func @matmul_lrelu_kernel(%arg0: i32, %arg1: i32, %arg2: memref<256x128xbf16, #tpu.memory_space<vmem>>, %arg3: memref<128x128xbf16, #tpu.memory_space<vmem>>, %arg4: memref<256x128xbf16, #tpu.memory_space<vmem>>, %arg5: memref<256x128xf32, #tpu.memory_space<vmem>>) attributes {dimension_semantics = [#tpu.dimension_semantics<parallel>, #tpu.dimension_semantics<arbitrary>], iteration_bounds = array<i64: 1, 1>, scalar_prefetch = 0 : i64, scratch_operands = 1 : i64, tpu.core_type = #tpu.core_type<tc>, window_params = [{transform_indices = @transform_0, window_bounds = array<i64: 256, 128>}, {transform_indices = @transform_1, window_bounds = array<i64: 128, 128>}, {transform_indices = @transform_2, window_bounds = array<i64: 256, 128>}]} {
    %c0_i32 = arith.constant 0 : i32
    %0 = arith.cmpi eq, %arg1, %c0_i32 : i32
    %1 = arith.extui %0 : i1 to i32
    %c0_i32_0 = arith.constant 0 : i32
    %2 = arith.cmpi ne, %1, %c0_i32_0 : i32
    scf.if %2 {
      %cst_10 = arith.constant 0.000000e+00 : f32
      %12 = vector.broadcast %cst_10 : f32 to vector<256x128xf32>
      %c0_11 = arith.constant 0 : index
      %c0_12 = arith.constant 0 : index
      %13 = vector.load %arg5[%c0_11, %c0_12] : memref<256x128xf32, #tpu.memory_space<vmem>>, vector<256x128xf32>
      tpu.vector_store %arg5[%c0_11, %c0_12], %12 {strides = array<i32>} : memref<256x128xf32, #tpu.memory_space<vmem>>, vector<256x128xf32>,
    } else {
    }
    %c0 = arith.constant 0 : index
    %c0_1 = arith.constant 0 : index
    %3 = vector.load %arg5[%c0, %c0_1] : memref<256x128xf32, #tpu.memory_space<vmem>>, vector<256x128xf32>
    %c0_2 = arith.constant 0 : index
    %c0_3 = arith.constant 0 : index
    %4 = vector.load %arg2[%c0_2, %c0_3] : memref<256x128xbf16, #tpu.memory_space<vmem>>, vector<256x128xbf16>
    %c0_4 = arith.constant 0 : index
    %c0_5 = arith.constant 0 : index
    %5 = vector.load %arg3[%c0_4, %c0_5] : memref<128x128xbf16, #tpu.memory_space<vmem>>, vector<128x128xbf16>
    %cst = arith.constant dense<0.000000e+00> : vector<256x128xf32>
    %6 = tpu.matmul %4, %5, %cst {dimension_numbers = #tpu.dot_dimension_numbers<[1], [0], [0], [1], [0, 0, 1, 1], [], []>} : vector<256x128xbf16>, vector<128x128xbf16>, vector<256x128xf32> -> vector<256x128xf32>
    %7 = arith.addf %3, %6 : vector<256x128xf32>
    %c0_6 = arith.constant 0 : index
    %c0_7 = arith.constant 0 : index
    %8 = vector.load %arg5[%c0_6, %c0_7] : memref<256x128xf32, #tpu.memory_space<vmem>>, vector<256x128xf32>
    tpu.vector_store %arg5[%c0_6, %c0_7], %7 {strides = array<i32>} : memref<256x128xf32, #tpu.memory_space<vmem>>, vector<256x128xf32>,
    %c0_i32_8 = arith.constant 0 : i32
    %9 = arith.cmpi eq, %arg1, %c0_i32_8 : i32
    %10 = arith.extui %9 : i1 to i32
    %c0_i32_9 = arith.constant 0 : i32
    %11 = arith.cmpi ne, %10, %c0_i32_9 : i32
    scf.if %11 {
      %c0_10 = arith.constant 0 : index
      %c0_11 = arith.constant 0 : index
      %12 = vector.load %arg5[%c0_10, %c0_11] : memref<256x128xf32, #tpu.memory_space<vmem>>, vector<256x128xf32>
      %cst_12 = arith.constant 0.000000e+00 : f32
      %13 = vector.broadcast %cst_12 : f32 to vector<256x128xf32>
      %14 = arith.maximumf %12, %13 : vector<256x128xf32>
      %cst_13 = arith.constant 0.000000e+00 : f32
      %15 = vector.broadcast %cst_13 : f32 to vector<256x128xf32>
      %16 = arith.minimumf %12, %15 : vector<256x128xf32>
      %cst_14 = arith.constant 0.00999999977 : f32
      %17 = vector.broadcast %cst_14 : f32 to vector<256x128xf32>
      %18 = arith.mulf %17, %16 : vector<256x128xf32>
      %19 = arith.addf %14, %18 : vector<256x128xf32>
      %20 = arith.truncf %19 : vector<256x128xf32> to vector<256x128xbf16>
      %c0_15 = arith.constant 0 : index
      %c0_16 = arith.constant 0 : index
      %21 = vector.load %arg4[%c0_15, %c0_16] : memref<256x128xbf16, #tpu.memory_space<vmem>>, vector<256x128xbf16>
      tpu.vector_store %arg4[%c0_15, %c0_16], %20 {strides = array<i32>} : memref<256x128xbf16, #tpu.memory_space<vmem>>, vector<256x128xbf16>,
    } else {
    }
    return
  }
  func.func @transform_0(%arg0: i32, %arg1: i32) -> (i32, i32) {
    %c0_i32 = arith.constant 0 : i32
    return %arg0, %arg1 : i32, i32
  }
  func.func @transform_1(%arg0: i32, %arg1: i32) -> (i32, i32) {
    %c0_i32 = arith.constant 0 : i32
    %c0_i32_0 = arith.constant 0 : i32
    return %arg1, %c0_i32 : i32, i32
  }
  func.func @transform_2(%arg0: i32, %arg1: i32) -> (i32, i32) {
    %c0_i32 = arith.constant 0 : i32
    %c0_i32_0 = arith.constant 0 : i32
    return %arg0, %c0_i32 : i32, i32
  }
}

</mosaic_0001>

<llo_original>
// kernel: tpu_custom_call.1
$region0: #{tpu_custom_call.1}
  #allocation0 [shape = 'u32[]', space=smem, size = 0x4, offset = 0x4, fixed_abs, tag = 'smem constant byte address 0x4 - core index']
  #allocation1 [shape = 'u32[144,128]{1,0:T(1,128)}', space=vmem, size = 0x12000, scoped, tag = 'internal scratch']
  #allocation2 [shape = 'f32[256,128]{1,0:T(8,128)}', space=vmem, size = 0x20000, scoped, tag = 'scratch operand']
  %s0 = inlined_call_operand.hbm [shape: bf16[256,128], index: 0, kind: input, shape index: {}]
  %s1 = inlined_call_operand.hbm [shape: bf16[128,128], index: 1, kind: input, shape index: {}]
  %s2 = inlined_call_operand.hbm [shape: bf16[256,128], index: 2, kind: output, shape index: {}]
  %s3 = sld [smem:[#allocation0]]
  $region34: #{tpu_custom_call.1} parent=0
    _
  %s5 = ssub.s32 1, %s3
  %s6 = scalar_select 0, %s5, %s3
  $region1: #{tpu_custom_call.1} parent=0
    #allocation3 [shape = 'u8[65536]{0}', space=vmem, size = 0x10000, scoped, tag = 'input window, operand 0, single buffered']
    #allocation4 [shape = 's32[1]{0}', space=sflag, size = 0x4, scoped, tag = 'scoped memory for tpu_custom_call.1']
    #allocation5 [shape = 's32[1]{0}', space=sflag, size = 0x4, scoped, tag = 'scoped memory for tpu_custom_call.1']
    #allocation6 [shape = 'u8[32768]{0}', space=vmem, size = 0x8000, scoped, tag = 'input window, operand 1, single buffered']
    #allocation7 [shape = 's32[1]{0}', space=sflag, size = 0x4, scoped, tag = 'scoped memory for tpu_custom_call.1']
    #allocation8 [shape = 'u8[65536]{0}', space=vmem, size = 0x10000, scoped, tag = 'output window, operand 0, single buffered']
    %7 = vsyncpa [#allocation4], 0
    %8 = vsyncpa [#allocation7], 0
    %9 = vsyncpa [#allocation5], 0
    // Predicated region
    $region2: #{tpu_custom_call.1} parent=1 // pred_check
      _
    $region3: #{tpu_custom_call.1} parent=1 // pred_check_branch
      %11 = sbr.rel (0) target = $region5
    $region4: #{tpu_custom_call.1} parent=1 // pred_region
      %s13 = ssub.s32 2048, 2048
      %14 = vsyncadd [#allocation4], %s13
      %s15 = sshll.u32 [#allocation3], 4
      %s16 = int_to_ptr.vmem [resolvable:$true] %s15
      %21 = dma.hbm_to_vmem [thread:$0]  %s0, 2048, %s16, [#allocation4], 64, 64, 4
    $region5: #{tpu_custom_call.1} parent=1 // pred_fallthru
      _
    // Predicated region
    $region6: #{tpu_custom_call.1} parent=1 // pred_check
      _
    $region7: #{tpu_custom_call.1} parent=1 // pred_check_branch
      %23 = sbr.rel (0) target = $region9
    $region8: #{tpu_custom_call.1} parent=1 // pred_region
      %s25 = ssub.s32 1024, 1024
      %26 = vsyncadd [#allocation7], %s25
      %s27 = sshll.u32 [#allocation6], 4
      %s28 = int_to_ptr.vmem [resolvable:$true] %s27
      %33 = dma.hbm_to_vmem [thread:$0]  %s1, 1024, %s28, [#allocation7], 64, 64, 4
    $region9: #{tpu_custom_call.1} parent=1 // pred_fallthru
      _
    // Predicated region
    $region10: #{tpu_custom_call.1} parent=1 // pred_check
      _
    $region11: #{tpu_custom_call.1} parent=1 // pred_check_branch
      %35 = sbr.rel (0) target = $region13
    $region12: #{tpu_custom_call.1} parent=1 // pred_region
      %36 = dma.done [#allocation4], 2048
    $region13: #{tpu_custom_call.1} parent=1 // pred_fallthru
      _
    // Predicated region
    $region14: #{tpu_custom_call.1} parent=1 // pred_check
      _
    $region15: #{tpu_custom_call.1} parent=1 // pred_check_branch
      %38 = sbr.rel (0) target = $region17
    $region16: #{tpu_custom_call.1} parent=1 // pred_region
      %39 = dma.done [#allocation7], 1024
    $region17: #{tpu_custom_call.1} parent=1 // pred_fallthru
      _
    %p41 = scmp.eq.s32.totalorder 0, 0
    // Predicated region
    $region18: #{tpu_custom_call.1} parent=1 // pred_check
      %p42 = pneg %p41
    $region19: #{tpu_custom_call.1} parent=1 // pred_check_branch
      %44 = sbr.rel (%p42) target = $region21
    $region20: #{tpu_custom_call.1} parent=1 // pred_region
      %45 = vst [vmem:[#allocation2] sm:$0xff] 0.0
      %46 = vst [vmem:[#allocation2 + $0x8] sm:$0xff] 0.0
      %47 = vst [vmem:[#allocation2 + $0x10] sm:$0xff] 0.0
      %48 = vst [vmem:[#allocation2 + $0x18] sm:$0xff] 0.0
      %49 = vst [vmem:[#allocation2 + $0x20] sm:$0xff] 0.0
      %50 = vst [vmem:[#allocation2 + $0x28] sm:$0xff] 0.0
      %51 = vst [vmem:[#allocation2 + $0x30] sm:$0xff] 0.0
      %52 = vst [vmem:[#allocation2 + $0x38] sm:$0xff] 0.0
      %53 = vst [vmem:[#allocation2 + $0x40] sm:$0xff] 0.0
      %54 = vst [vmem:[#allocation2 + $0x48] sm:$0xff] 0.0
      %55 = vst [vmem:[#allocation2 + $0x50] sm:$0xff] 0.0
      %56 = vst [vmem:[#allocation2 + $0x58] sm:$0xff] 0.0
      %57 = vst [vmem:[#allocation2 + $0x60] sm:$0xff] 0.0
      %58 = vst [vmem:[#allocation2 + $0x68] sm:$0xff] 0.0
      %59 = vst [vmem:[#allocation2 + $0x70] sm:$0xff] 0.0
      %60 = vst [vmem:[#allocation2 + $0x78] sm:$0xff] 0.0
      %61 = vst [vmem:[#allocation2 + $0x80] sm:$0xff] 0.0
      %62 = vst [vmem:[#allocation2 + $0x88] sm:$0xff] 0.0
      %63 = vst [vmem:[#allocation2 + $0x90] sm:$0xff] 0.0
      %64 = vst [vmem:[#allocation2 + $0x98] sm:$0xff] 0.0
      %65 = vst [vmem:[#allocation2 + $0xa0] sm:$0xff] 0.0
      %66 = vst [vmem:[#allocation2 + $0xa8] sm:$0xff] 0.0
      %67 = vst [vmem:[#allocation2 + $0xb0] sm:$0xff] 0.0
      %68 = vst [vmem:[#allocation2 + $0xb8] sm:$0xff] 0.0
      %69 = vst [vmem:[#allocation2 + $0xc0] sm:$0xff] 0.0
      %70 = vst [vmem:[#allocation2 + $0xc8] sm:$0xff] 0.0
      %71 = vst [vmem:[#allocation2 + $0xd0] sm:$0xff] 0.0
      %72 = vst [vmem:[#allocation2 + $0xd8] sm:$0xff] 0.0
      %73 = vst [vmem:[#allocation2 + $0xe0] sm:$0xff] 0.0
      %74 = vst [vmem:[#allocation2 + $0xe8] sm:$0xff] 0.0
      %75 = vst [vmem:[#allocation2 + $0xf0] sm:$0xff] 0.0
      %76 = vst [vmem:[#allocation2 + $0xf8] sm:$0xff] 0.0
    $region21: #{tpu_custom_call.1} parent=1 // pred_fallthru
      _
    %v77 = vld [vmem:[#allocation2] sm:$0xff]
    %v78 = vld [vmem:[#allocation2 + $0x8] sm:$0xff]
    %v79 = vld [vmem:[#allocation2 + $0x10] sm:$0xff]
    %v80 = vld [vmem:[#allocation2 + $0x18] sm:$0xff]
    %v81 = vld [vmem:[#allocation2 + $0x20] sm:$0xff]
    %v82 = vld [vmem:[#allocation2 + $0x28] sm:$0xff]
    %v83 = vld [vmem:[#allocation2 + $0x30] sm:$0xff]
    %v84 = vld [vmem:[#allocation2 + $0x38] sm:$0xff]
    %v85 = vld [vmem:[#allocation2 + $0x40] sm:$0xff]
    %v86 = vld [vmem:[#allocation2 + $0x48] sm:$0xff]
    %v87 = vld [vmem:[#allocation2 + $0x50] sm:$0xff]
    %v88 = vld [vmem:[#allocation2 + $0x58] sm:$0xff]
    %v89 = vld [vmem:[#allocation2 + $0x60] sm:$0xff]
    %v90 = vld [vmem:[#allocation2 + $0x68] sm:$0xff]
    %v91 = vld [vmem:[#allocation2 + $0x70] sm:$0xff]
    %v92 = vld [vmem:[#allocation2 + $0x78] sm:$0xff]
    %v93 = vld [vmem:[#allocation2 + $0x80] sm:$0xff]
    %v94 = vld [vmem:[#allocation2 + $0x88] sm:$0xff]
    %v95 = vld [vmem:[#allocation2 + $0x90] sm:$0xff]
    %v96 = vld [vmem:[#allocation2 + $0x98] sm:$0xff]
    %v97 = vld [vmem:[#allocation2 + $0xa0] sm:$0xff]
    %v98 = vld [vmem:[#allocation2 + $0xa8] sm:$0xff]
    %v99 = vld [vmem:[#allocation2 + $0xb0] sm:$0xff]
    %v100 = vld [vmem:[#allocation2 + $0xb8] sm:$0xff]
    %v101 = vld [vmem:[#allocation2 + $0xc0] sm:$0xff]
    %v102 = vld [vmem:[#allocation2 + $0xc8] sm:$0xff]
    %v103 = vld [vmem:[#allocation2 + $0xd0] sm:$0xff]
    %v104 = vld [vmem:[#allocation2 + $0xd8] sm:$0xff]
    %v105 = vld [vmem:[#allocation2 + $0xe0] sm:$0xff]
    %v106 = vld [vmem:[#allocation2 + $0xe8] sm:$0xff]
    %v107 = vld [vmem:[#allocation2 + $0xf0] sm:$0xff]
    %v108 = vld [vmem:[#allocation2 + $0xf8] sm:$0xff]
    %v109 = vld [vmem:[#allocation3] sm:$0xf]
    %v110 = vld [vmem:[#allocation3 + $0x4] sm:$0xf]
    %v111 = vld [vmem:[#allocation3 + $0x8] sm:$0xf]
    %v112 = vld [vmem:[#allocation3 + $0xc] sm:$0xf]
    %v113 = vld [vmem:[#allocation3 + $0x10] sm:$0xf]
    %v114 = vld [vmem:[#allocation3 + $0x14] sm:$0xf]
    %v115 = vld [vmem:[#allocation3 + $0x18] sm:$0xf]
    %v116 = vld [vmem:[#allocation3 + $0x1c] sm:$0xf]
    %v117 = vld [vmem:[#allocation3 + $0x20] sm:$0xf]
    %v118 = vld [vmem:[#allocation3 + $0x24] sm:$0xf]
    %v119 = vld [vmem:[#allocation3 + $0x28] sm:$0xf]
    %v120 = vld [vmem:[#allocation3 + $0x2c] sm:$0xf]
    %v121 = vld [vmem:[#allocation3 + $0x30] sm:$0xf]
    %v122 = vld [vmem:[#allocation3 + $0x34] sm:$0xf]
    %v123 = vld [vmem:[#allocation3 + $0x38] sm:$0xf]
    %v124 = vld [vmem:[#allocation3 + $0x3c] sm:$0xf]
    %v125 = vld [vmem:[#allocation3 + $0x40] sm:$0xf]
    %v126 = vld [vmem:[#allocation3 + $0x44] sm:$0xf]
    %v127 = vld [vmem:[#allocation3 + $0x48] sm:$0xf]
    %v128 = vld [vmem:[#allocation3 + $0x4c] sm:$0xf]
    %v129 = vld [vmem:[#allocation3 + $0x50] sm:$0xf]
    %v130 = vld [vmem:[#allocation3 + $0x54] sm:$0xf]
    %v131 = vld [vmem:[#allocation3 + $0x58] sm:$0xf]
    %v132 = vld [vmem:[#allocation3 + $0x5c] sm:$0xf]
    %v133 = vld [vmem:[#allocation3 + $0x60] sm:$0xf]
    %v134 = vld [vmem:[#allocation3 + $0x64] sm:$0xf]
    %v135 = vld [vmem:[#allocation3 + $0x68] sm:$0xf]
    %v136 = vld [vmem:[#allocation3 + $0x6c] sm:$0xf]
    %v137 = vld [vmem:[#allocation3 + $0x70] sm:$0xf]
    %v138 = vld [vmem:[#allocation3 + $0x74] sm:$0xf]
    %v139 = vld [vmem:[#allocation3 + $0x78] sm:$0xf]
    %v140 = vld [vmem:[#allocation3 + $0x7c] sm:$0xf]
    %v141 = vld [vmem:[#allocation6] sm:$0xf]
    %v142 = vld [vmem:[#allocation6 + $0x4] sm:$0xf]
    %v143 = vld [vmem:[#allocation6 + $0x8] sm:$0xf]
    %v144 = vld [vmem:[#allocation6 + $0xc] sm:$0xf]
    %v145 = vld [vmem:[#allocation6 + $0x10] sm:$0xf]
    %v146 = vld [vmem:[#allocation6 + $0x14] sm:$0xf]
    %v147 = vld [vmem:[#allocation6 + $0x18] sm:$0xf]
    %v148 = vld [vmem:[#allocation6 + $0x1c] sm:$0xf]
    %v149 = vld [vmem:[#allocation6 + $0x20] sm:$0xf]
    %v150 = vld [vmem:[#allocation6 + $0x24] sm:$0xf]
    %v151 = vld [vmem:[#allocation6 + $0x28] sm:$0xf]
    %v152 = vld [vmem:[#allocation6 + $0x2c] sm:$0xf]
    %v153 = vld [vmem:[#allocation6 + $0x30] sm:$0xf]
    %v154 = vld [vmem:[#allocation6 + $0x34] sm:$0xf]
    %v155 = vld [vmem:[#allocation6 + $0x38] sm:$0xf]
    %v156 = vld [vmem:[#allocation6 + $0x3c] sm:$0xf]
    %v189 = vunpack.c.l.b16 %v109
    %v190 = vunpack.c.l.b16 %v110
    %v191 = vunpack.c.l.b16 %v111
    %v192 = vunpack.c.l.b16 %v112
    %v193 = vunpack.c.l.b16 %v113
    %v194 = vunpack.c.l.b16 %v114
    %v195 = vunpack.c.l.b16 %v115
    %v196 = vunpack.c.l.b16 %v116
    %v197 = vunpack.c.l.b16 %v117
    %v198 = vunpack.c.l.b16 %v118
    %v199 = vunpack.c.l.b16 %v119
    %v200 = vunpack.c.l.b16 %v120
    %v201 = vunpack.c.l.b16 %v121
    %v202 = vunpack.c.l.b16 %v122
    %v203 = vunpack.c.l.b16 %v123
    %v204 = vunpack.c.l.b16 %v124
    %v205 = vunpack.c.l.b16 %v125
    %v206 = vunpack.c.l.b16 %v126
    %v207 = vunpack.c.l.b16 %v127
    %v208 = vunpack.c.l.b16 %v128
    %v209 = vunpack.c.l.b16 %v129
    %v210 = vunpack.c.l.b16 %v130
    %v211 = vunpack.c.l.b16 %v131
    %v212 = vunpack.c.l.b16 %v132
    %v213 = vunpack.c.l.b16 %v133
    %v214 = vunpack.c.l.b16 %v134
    %v215 = vunpack.c.l.b16 %v135
    %v216 = vunpack.c.l.b16 %v136
    %v217 = vunpack.c.l.b16 %v137
    %v218 = vunpack.c.l.b16 %v138
    %v219 = vunpack.c.l.b16 %v139
    %v220 = vunpack.c.l.b16 %v140
    %v221 = vpack.c.b16 %v190, %v189
    %v222 = vpack.c.b16 %v192, %v191
    %v223 = vpack.c.b16 %v194, %v193
    %v224 = vpack.c.b16 %v196, %v195
    %v225 = vpack.c.b16 %v198, %v197
    %v226 = vpack.c.b16 %v200, %v199
    %v227 = vpack.c.b16 %v202, %v201
    %v228 = vpack.c.b16 %v204, %v203
    %v229 = vpack.c.b16 %v206, %v205
    %v230 = vpack.c.b16 %v208, %v207
    %v231 = vpack.c.b16 %v210, %v209
    %v232 = vpack.c.b16 %v212, %v211
    %v233 = vpack.c.b16 %v214, %v213
    %v234 = vpack.c.b16 %v216, %v215
    %v235 = vpack.c.b16 %v218, %v217
    %v236 = vpack.c.b16 %v220, %v219
    %v269 = vunpack.c.l.b16 %v141
    %v270 = vunpack.c.l.b16 %v142
    %v271 = vunpack.c.l.b16 %v143
    %v272 = vunpack.c.l.b16 %v144
    %v273 = vunpack.c.l.b16 %v145
    %v274 = vunpack.c.l.b16 %v146
    %v275 = vunpack.c.l.b16 %v147
    %v276 = vunpack.c.l.b16 %v148
    %v277 = vunpack.c.l.b16 %v149
    %v278 = vunpack.c.l.b16 %v150
    %v279 = vunpack.c.l.b16 %v151
    %v280 = vunpack.c.l.b16 %v152
    %v281 = vunpack.c.l.b16 %v153
    %v282 = vunpack.c.l.b16 %v154
    %v283 = vunpack.c.l.b16 %v155
    %v284 = vunpack.c.l.b16 %v156
    %v285 = vpack.c.b16 %v270, %v269
    %v286 = vpack.c.b16 %v272, %v271
    %v287 = vpack.c.b16 %v274, %v273
    %v288 = vpack.c.b16 %v276, %v275
    %v289 = vpack.c.b16 %v278, %v277
    %v290 = vpack.c.b16 %v280, %v279
    %v291 = vpack.c.b16 %v282, %v281
    %v292 = vpack.c.b16 %v284, %v283
    %301 = vmatprep.subr.bf16.mxu0 0
    %302 = vmatpush1.bf16.msra.mxu0 %v292
    %303 = vmatprep.subr.bf16.mxu0 0
    %304 = vmatpush1.bf16.msra.mxu0 %v291
    %305 = vmatprep.subr.bf16.mxu0 0
    %306 = vmatpush1.bf16.msra.mxu0 %v290
    %307 = vmatprep.subr.bf16.mxu0 0
    %308 = vmatpush1.bf16.msra.mxu0 %v289
    %309 = vmatprep.subr.bf16.mxu0 0
    %310 = vmatpush1.bf16.msra.mxu0 %v288
    %311 = vmatprep.subr.bf16.mxu0 0
    %312 = vmatpush1.bf16.msra.mxu0 %v287
    %313 = vmatprep.subr.bf16.mxu0 0
    %314 = vmatpush1.bf16.msra.mxu0 %v286
    %315 = vmatprep.subr.bf16.mxu0 0
    %316 = vmatpush1.bf16.msra.mxu0 %v285
    %317 = vmatprep.subr.bf16.mxu0 0
    %318 = vmatpush2.bf16.msra.mxu0 0
    %319 = vmatprep.subr.bf16.mxu0 0
    %320 = vmatpush2.bf16.msra.mxu0 0
    %321 = vmatprep.subr.bf16.mxu0 0
    %322 = vmatpush2.bf16.msra.mxu0 0
    %323 = vmatprep.subr.bf16.mxu0 0
    %324 = vmatpush2.bf16.msra.mxu0 0
    %325 = vmatprep.subr.bf16.mxu0 0
    %326 = vmatpush2.bf16.msra.mxu0 0
    %327 = vmatprep.subr.bf16.mxu0 0
    %328 = vmatpush2.bf16.msra.mxu0 0
    %329 = vmatprep.subr.bf16.mxu0 0
    %330 = vmatpush2.bf16.msra.mxu0 0
    %331 = vmatprep.subr.bf16.mxu0 0
    %332 = vmatpush2.bf16.msra.mxu0 0
    %333 = vmatprep.mubr.bf16.mxu0 0
    %334 = vmatmul.mubr.bf16.gmra.mxu0 %v221
    %v335 = vpop.f32.mrf.mxu0
    %v336 = vadd.f32 0.0, %v335
    %v337 = vpop.f32.mrf.mxu0
    %v338 = vpop.f32.mrf.mxu0
    %v339 = vadd.f32 0.0, %v338
    %v340 = vpop.f32.mrf.mxu0
    %341 = vmatprep.mubr.bf16.mxu0 0
    %342 = vmatmul.mubr.bf16.gmra.mxu0 %v222
    %v343 = vpop.f32.mrf.mxu0
    %v344 = vadd.f32 0.0, %v343
    %v345 = vpop.f32.mrf.mxu0
    %v346 = vpop.f32.mrf.mxu0
    %v347 = vadd.f32 0.0, %v346
    %v348 = vpop.f32.mrf.mxu0
    %349 = vmatprep.mubr.bf16.mxu0 0
    %350 = vmatmul.mubr.bf16.gmra.mxu0 %v223
    %v351 = vpop.f32.mrf.mxu0
    %v352 = vadd.f32 0.0, %v351
    %v353 = vpop.f32.mrf.mxu0
    %v354 = vpop.f32.mrf.mxu0
    %v355 = vadd.f32 0.0, %v354
    %v356 = vpop.f32.mrf.mxu0
    %357 = vmatprep.mubr.bf16.mxu0 0
    %358 = vmatmul.mubr.bf16.gmra.mxu0 %v224
    %v359 = vpop.f32.mrf.mxu0
    %v360 = vadd.f32 0.0, %v359
    %v361 = vpop.f32.mrf.mxu0
    %v362 = vpop.f32.mrf.mxu0
    %v363 = vadd.f32 0.0, %v362
    %v364 = vpop.f32.mrf.mxu0
    %365 = vmatprep.mubr.bf16.mxu0 0
    %366 = vmatmul.mubr.bf16.gmra.mxu0 %v225
    %v367 = vpop.f32.mrf.mxu0
    %v368 = vadd.f32 0.0, %v367
    %v369 = vpop.f32.mrf.mxu0
    %v370 = vpop.f32.mrf.mxu0
    %v371 = vadd.f32 0.0, %v370
    %v372 = vpop.f32.mrf.mxu0
    %373 = vmatprep.mubr.bf16.mxu0 0
    %374 = vmatmul.mubr.bf16.gmra.mxu0 %v226
    %v375 = vpop.f32.mrf.mxu0
    %v376 = vadd.f32 0.0, %v375
    %v377 = vpop.f32.mrf.mxu0
    %v378 = vpop.f32.mrf.mxu0
    %v379 = vadd.f32 0.0, %v378
    %v380 = vpop.f32.mrf.mxu0
    %381 = vmatprep.mubr.bf16.mxu0 0
    %382 = vmatmul.mubr.bf16.gmra.mxu0 %v227
    %v383 = vpop.f32.mrf.mxu0
    %v384 = vadd.f32 0.0, %v383
    %v385 = vpop.f32.mrf.mxu0
    %v386 = vpop.f32.mrf.mxu0
    %v387 = vadd.f32 0.0, %v386
    %v388 = vpop.f32.mrf.mxu0
    %389 = vmatprep.mubr.bf16.mxu0 0
    %390 = vmatmul.mubr.bf16.gmra.mxu0 %v228
    %v391 = vpop.f32.mrf.mxu0
    %v392 = vadd.f32 0.0, %v391
    %v393 = vpop.f32.mrf.mxu0
    %v394 = vpop.f32.mrf.mxu0
    %v395 = vadd.f32 0.0, %v394
    %v396 = vpop.f32.mrf.mxu0
    %397 = vmatprep.mubr.bf16.mxu0 0
    %398 = vmatmul.mubr.bf16.gmra.mxu0 %v229
    %v399 = vpop.f32.mrf.mxu0
    %v400 = vadd.f32 0.0, %v399
    %v401 = vpop.f32.mrf.mxu0
    %v402 = vpop.f32.mrf.mxu0
    %v403 = vadd.f32 0.0, %v402
    %v404 = vpop.f32.mrf.mxu0
    %405 = vmatprep.mubr.bf16.mxu0 0
    %406 = vmatmul.mubr.bf16.gmra.mxu0 %v230
    %v407 = vpop.f32.mrf.mxu0
    %v408 = vadd.f32 0.0, %v407
    %v409 = vpop.f32.mrf.mxu0
    %v410 = vpop.f32.mrf.mxu0
    %v411 = vadd.f32 0.0, %v410
    %v412 = vpop.f32.mrf.mxu0
    %413 = vmatprep.mubr.bf16.mxu0 0
    %414 = vmatmul.mubr.bf16.gmra.mxu0 %v231
    %v415 = vpop.f32.mrf.mxu0
    %v416 = vadd.f32 0.0, %v415
    %v417 = vpop.f32.mrf.mxu0
    %v418 = vpop.f32.mrf.mxu0
    %v419 = vadd.f32 0.0, %v418
    %v420 = vpop.f32.mrf.mxu0
    %421 = vmatprep.mubr.bf16.mxu0 0
    %422 = vmatmul.mubr.bf16.gmra.mxu0 %v232
    %v423 = vpop.f32.mrf.mxu0
    %v424 = vadd.f32 0.0, %v423
    %v425 = vpop.f32.mrf.mxu0
    %v426 = vpop.f32.mrf.mxu0
    %v427 = vadd.f32 0.0, %v426
    %v428 = vpop.f32.mrf.mxu0
    %429 = vmatprep.mubr.bf16.mxu0 0
    %430 = vmatmul.mubr.bf16.gmra.mxu0 %v233
    %v431 = vpop.f32.mrf.mxu0
    %v432 = vadd.f32 0.0, %v431
    %v433 = vpop.f32.mrf.mxu0
    %v434 = vpop.f32.mrf.mxu0
    %v435 = vadd.f32 0.0, %v434
    %v436 = vpop.f32.mrf.mxu0
    %437 = vmatprep.mubr.bf16.mxu0 0
    %438 = vmatmul.mubr.bf16.gmra.mxu0 %v234
    %v439 = vpop.f32.mrf.mxu0
    %v440 = vadd.f32 0.0, %v439
    %v441 = vpop.f32.mrf.mxu0
    %v442 = vpop.f32.mrf.mxu0
    %v443 = vadd.f32 0.0, %v442
    %v444 = vpop.f32.mrf.mxu0
    %445 = vmatprep.mubr.bf16.mxu0 0
    %446 = vmatmul.mubr.bf16.gmra.mxu0 %v235
    %v447 = vpop.f32.mrf.mxu0
    %v448 = vadd.f32 0.0, %v447
    %v449 = vpop.f32.mrf.mxu0
    %v450 = vpop.f32.mrf.mxu0
    %v451 = vadd.f32 0.0, %v450
    %v452 = vpop.f32.mrf.mxu0
    %453 = vmatprep.mubr.bf16.mxu0 0
    %454 = vmatmul.mubr.bf16.gmra.mxu0 %v236
    %v455 = vpop.f32.mrf.mxu0
    %v456 = vadd.f32 0.0, %v455
    %v457 = vpop.f32.mrf.mxu0
    %v458 = vpop.f32.mrf.mxu0
    %v459 = vadd.f32 0.0, %v458
    %v460 = vpop.f32.mrf.mxu0
    %461 = vdwg.mxu0
    %v462 = vadd.f32 %v77, %v336
    %v463 = vadd.f32 %v78, %v339
    %v464 = vadd.f32 %v79, %v344
    %v465 = vadd.f32 %v80, %v347
    %v466 = vadd.f32 %v81, %v352
    %v467 = vadd.f32 %v82, %v355
    %v468 = vadd.f32 %v83, %v360
    %v469 = vadd.f32 %v84, %v363
    %v470 = vadd.f32 %v85, %v368
    %v471 = vadd.f32 %v86, %v371
    %v472 = vadd.f32 %v87, %v376
    %v473 = vadd.f32 %v88, %v379
    %v474 = vadd.f32 %v89, %v384
    %v475 = vadd.f32 %v90, %v387
    %v476 = vadd.f32 %v91, %v392
    %v477 = vadd.f32 %v92, %v395
    %v478 = vadd.f32 %v93, %v400
    %v479 = vadd.f32 %v94, %v403
    %v480 = vadd.f32 %v95, %v408
    %v481 = vadd.f32 %v96, %v411
    %v482 = vadd.f32 %v97, %v416
    %v483 = vadd.f32 %v98, %v419
    %v484 = vadd.f32 %v99, %v424
    %v485 = vadd.f32 %v100, %v427
    %v486 = vadd.f32 %v101, %v432
    %v487 = vadd.f32 %v102, %v435
    %v488 = vadd.f32 %v103, %v440
    %v489 = vadd.f32 %v104, %v443
    %v490 = vadd.f32 %v105, %v448
    %v491 = vadd.f32 %v106, %v451
    %v492 = vadd.f32 %v107, %v456
    %v493 = vadd.f32 %v108, %v459
    %494 = vst [vmem:[#allocation2] sm:$0xff] %v462
    %495 = vst [vmem:[#allocation2 + $0x8] sm:$0xff] %v463
    %496 = vst [vmem:[#allocation2 + $0x10] sm:$0xff] %v464
    %497 = vst [vmem:[#allocation2 + $0x18] sm:$0xff] %v465
    %498 = vst [vmem:[#allocation2 + $0x20] sm:$0xff] %v466
    %499 = vst [vmem:[#allocation2 + $0x28] sm:$0xff] %v467
    %500 = vst [vmem:[#allocation2 + $0x30] sm:$0xff] %v468
    %501 = vst [vmem:[#allocation2 + $0x38] sm:$0xff] %v469
    %502 = vst [vmem:[#allocation2 + $0x40] sm:$0xff] %v470
    %503 = vst [vmem:[#allocation2 + $0x48] sm:$0xff] %v471
    %504 = vst [vmem:[#allocation2 + $0x50] sm:$0xff] %v472
    %505 = vst [vmem:[#allocation2 + $0x58] sm:$0xff] %v473
    %506 = vst [vmem:[#allocation2 + $0x60] sm:$0xff] %v474
    %507 = vst [vmem:[#allocation2 + $0x68] sm:$0xff] %v475
    %508 = vst [vmem:[#allocation2 + $0x70] sm:$0xff] %v476
    %509 = vst [vmem:[#allocation2 + $0x78] sm:$0xff] %v477
    %510 = vst [vmem:[#allocation2 + $0x80] sm:$0xff] %v478
    %511 = vst [vmem:[#allocation2 + $0x88] sm:$0xff] %v479
    %512 = vst [vmem:[#allocation2 + $0x90] sm:$0xff] %v480
    %513 = vst [vmem:[#allocation2 + $0x98] sm:$0xff] %v481
    %514 = vst [vmem:[#allocation2 + $0xa0] sm:$0xff] %v482
    %515 = vst [vmem:[#allocation2 + $0xa8] sm:$0xff] %v483
    %516 = vst [vmem:[#allocation2 + $0xb0] sm:$0xff] %v484
    %517 = vst [vmem:[#allocation2 + $0xb8] sm:$0xff] %v485
    %518 = vst [vmem:[#allocation2 + $0xc0] sm:$0xff] %v486
    %519 = vst [vmem:[#allocation2 + $0xc8] sm:$0xff] %v487
    %520 = vst [vmem:[#allocation2 + $0xd0] sm:$0xff] %v488
    %521 = vst [vmem:[#allocation2 + $0xd8] sm:$0xff] %v489
    %522 = vst [vmem:[#allocation2 + $0xe0] sm:$0xff] %v490
    %523 = vst [vmem:[#allocation2 + $0xe8] sm:$0xff] %v491
    %524 = vst [vmem:[#allocation2 + $0xf0] sm:$0xff] %v492
    %525 = vst [vmem:[#allocation2 + $0xf8] sm:$0xff] %v493
    // Predicated region
    $region22: #{tpu_custom_call.1} parent=1 // pred_check
      %p526 = pneg %p41
    $region23: #{tpu_custom_call.1} parent=1 // pred_check_branch
      %528 = sbr.rel (%p526) target = $region25
    $region24: #{tpu_custom_call.1} parent=1 // pred_region
      %v529 = vld [vmem:[#allocation2] sm:$0xff]
      %v530 = vld [vmem:[#allocation2 + $0x8] sm:$0xff]
      %v531 = vld [vmem:[#allocation2 + $0x10] sm:$0xff]
      %v532 = vld [vmem:[#allocation2 + $0x18] sm:$0xff]
      %v533 = vld [vmem:[#allocation2 + $0x20] sm:$0xff]
      %v534 = vld [vmem:[#allocation2 + $0x28] sm:$0xff]
      %v535 = vld [vmem:[#allocation2 + $0x30] sm:$0xff]
      %v536 = vld [vmem:[#allocation2 + $0x38] sm:$0xff]
      %v537 = vld [vmem:[#allocation2 + $0x40] sm:$0xff]
      %v538 = vld [vmem:[#allocation2 + $0x48] sm:$0xff]
      %v539 = vld [vmem:[#allocation2 + $0x50] sm:$0xff]
      %v540 = vld [vmem:[#allocation2 + $0x58] sm:$0xff]
      %v541 = vld [vmem:[#allocation2 + $0x60] sm:$0xff]
      %v542 = vld [vmem:[#allocation2 + $0x68] sm:$0xff]
      %v543 = vld [vmem:[#allocation2 + $0x70] sm:$0xff]
      %v544 = vld [vmem:[#allocation2 + $0x78] sm:$0xff]
      %v545 = vld [vmem:[#allocation2 + $0x80] sm:$0xff]
      %v546 = vld [vmem:[#allocation2 + $0x88] sm:$0xff]
      %v547 = vld [vmem:[#allocation2 + $0x90] sm:$0xff]
      %v548 = vld [vmem:[#allocation2 + $0x98] sm:$0xff]
      %v549 = vld [vmem:[#allocation2 + $0xa0] sm:$0xff]
      %v550 = vld [vmem:[#allocation2 + $0xa8] sm:$0xff]
      %v551 = vld [vmem:[#allocation2 + $0xb0] sm:$0xff]
      %v552 = vld [vmem:[#allocation2 + $0xb8] sm:$0xff]
      %v553 = vld [vmem:[#allocation2 + $0xc0] sm:$0xff]
      %v554 = vld [vmem:[#allocation2 + $0xc8] sm:$0xff]
      %v555 = vld [vmem:[#allocation2 + $0xd0] sm:$0xff]
      %v556 = vld [vmem:[#allocation2 + $0xd8] sm:$0xff]
      %v557 = vld [vmem:[#allocation2 + $0xe0] sm:$0xff]
      %v558 = vld [vmem:[#allocation2 + $0xe8] sm:$0xff]
      %v559 = vld [vmem:[#allocation2 + $0xf0] sm:$0xff]
      %v560 = vld [vmem:[#allocation2 + $0xf8] sm:$0xff]
      %v561 = vmax.f32 %v529, 0.0
      %v562 = vmax.f32 %v530, 0.0
      %v563 = vmax.f32 %v531, 0.0
      %v564 = vmax.f32 %v532, 0.0
      %v565 = vmax.f32 %v533, 0.0
      %v566 = vmax.f32 %v534, 0.0
      %v567 = vmax.f32 %v535, 0.0
      %v568 = vmax.f32 %v536, 0.0
      %v569 = vmax.f32 %v537, 0.0
      %v570 = vmax.f32 %v538, 0.0
      %v571 = vmax.f32 %v539, 0.0
      %v572 = vmax.f32 %v540, 0.0
      %v573 = vmax.f32 %v541, 0.0
      %v574 = vmax.f32 %v542, 0.0
      %v575 = vmax.f32 %v543, 0.0
      %v576 = vmax.f32 %v544, 0.0
      %v577 = vmax.f32 %v545, 0.0
      %v578 = vmax.f32 %v546, 0.0
      %v579 = vmax.f32 %v547, 0.0
      %v580 = vmax.f32 %v548, 0.0
      %v581 = vmax.f32 %v549, 0.0
      %v582 = vmax.f32 %v550, 0.0
      %v583 = vmax.f32 %v551, 0.0
      %v584 = vmax.f32 %v552, 0.0
      %v585 = vmax.f32 %v553, 0.0
      %v586 = vmax.f32 %v554, 0.0
      %v587 = vmax.f32 %v555, 0.0
      %v588 = vmax.f32 %v556, 0.0
      %v589 = vmax.f32 %v557, 0.0
      %v590 = vmax.f32 %v558, 0.0
      %v591 = vmax.f32 %v559, 0.0
      %v592 = vmax.f32 %v560, 0.0
      %v593 = vmin.f32 %v529, 0.0
      %v594 = vmin.f32 %v530, 0.0
      %v595 = vmin.f32 %v531, 0.0
      %v596 = vmin.f32 %v532, 0.0
      %v597 = vmin.f32 %v533, 0.0
      %v598 = vmin.f32 %v534, 0.0
      %v599 = vmin.f32 %v535, 0.0
      %v600 = vmin.f32 %v536, 0.0
      %v601 = vmin.f32 %v537, 0.0
      %v602 = vmin.f32 %v538, 0.0
      %v603 = vmin.f32 %v539, 0.0
      %v604 = vmin.f32 %v540, 0.0
      %v605 = vmin.f32 %v541, 0.0
      %v606 = vmin.f32 %v542, 0.0
      %v607 = vmin.f32 %v543, 0.0
      %v608 = vmin.f32 %v544, 0.0
      %v609 = vmin.f32 %v545, 0.0
      %v610 = vmin.f32 %v546, 0.0
      %v611 = vmin.f32 %v547, 0.0
      %v612 = vmin.f32 %v548, 0.0
      %v613 = vmin.f32 %v549, 0.0
      %v614 = vmin.f32 %v550, 0.0
      %v615 = vmin.f32 %v551, 0.0
      %v616 = vmin.f32 %v552, 0.0
      %v617 = vmin.f32 %v553, 0.0
      %v618 = vmin.f32 %v554, 0.0
      %v619 = vmin.f32 %v555, 0.0
      %v620 = vmin.f32 %v556, 0.0
      %v621 = vmin.f32 %v557, 0.0
      %v622 = vmin.f32 %v558, 0.0
      %v623 = vmin.f32 %v559, 0.0
      %v624 = vmin.f32 %v560, 0.0
      %v625 = vmul.f32 %v593, 0.01
      %v626 = vmul.f32 %v594, 0.01
      %v627 = vmul.f32 %v595, 0.01
      %v628 = vmul.f32 %v596, 0.01
      %v629 = vmul.f32 %v597, 0.01
      %v630 = vmul.f32 %v598, 0.01
      %v631 = vmul.f32 %v599, 0.01
      %v632 = vmul.f32 %v600, 0.01
      %v633 = vmul.f32 %v601, 0.01
      %v634 = vmul.f32 %v602, 0.01
      %v635 = vmul.f32 %v603, 0.01
      %v636 = vmul.f32 %v604, 0.01
      %v637 = vmul.f32 %v605, 0.01
      %v638 = vmul.f32 %v606, 0.01
      %v639 = vmul.f32 %v607, 0.01
      %v640 = vmul.f32 %v608, 0.01
      %v641 = vmul.f32 %v609, 0.01
      %v642 = vmul.f32 %v610, 0.01
      %v643 = vmul.f32 %v611, 0.01
      %v644 = vmul.f32 %v612, 0.01
      %v645 = vmul.f32 %v613, 0.01
      %v646 = vmul.f32 %v614, 0.01
      %v647 = vmul.f32 %v615, 0.01
      %v648 = vmul.f32 %v616, 0.01
      %v649 = vmul.f32 %v617, 0.01
      %v650 = vmul.f32 %v618, 0.01
      %v651 = vmul.f32 %v619, 0.01
      %v652 = vmul.f32 %v620, 0.01
      %v653 = vmul.f32 %v621, 0.01
      %v654 = vmul.f32 %v622, 0.01
      %v655 = vmul.f32 %v623, 0.01
      %v656 = vmul.f32 %v624, 0.01
      %v657 = vadd.f32 %v561, %v625
      %v658 = vadd.f32 %v562, %v626
      %v659 = vadd.f32 %v563, %v627
      %v660 = vadd.f32 %v564, %v628
      %v661 = vadd.f32 %v565, %v629
      %v662 = vadd.f32 %v566, %v630
      %v663 = vadd.f32 %v567, %v631
      %v664 = vadd.f32 %v568, %v632
      %v665 = vadd.f32 %v569, %v633
      %v666 = vadd.f32 %v570, %v634
      %v667 = vadd.f32 %v571, %v635
      %v668 = vadd.f32 %v572, %v636
      %v669 = vadd.f32 %v573, %v637
      %v670 = vadd.f32 %v574, %v638
      %v671 = vadd.f32 %v575, %v639
      %v672 = vadd.f32 %v576, %v640
      %v673 = vadd.f32 %v577, %v641
      %v674 = vadd.f32 %v578, %v642
      %v675 = vadd.f32 %v579, %v643
      %v676 = vadd.f32 %v580, %v644
      %v677 = vadd.f32 %v581, %v645
      %v678 = vadd.f32 %v582, %v646
      %v679 = vadd.f32 %v583, %v647
      %v680 = vadd.f32 %v584, %v648
      %v681 = vadd.f32 %v585, %v649
      %v682 = vadd.f32 %v586, %v650
      %v683 = vadd.f32 %v587, %v651
      %v684 = vadd.f32 %v588, %v652
      %v685 = vadd.f32 %v589, %v653
      %v686 = vadd.f32 %v590, %v654
      %v687 = vadd.f32 %v591, %v655
      %v688 = vadd.f32 %v592, %v656
      %v689 = vpack.c.bf16 %v658, %v657
      %v690 = vpack.c.bf16 %v660, %v659
      %v691 = vpack.c.bf16 %v662, %v661
      %v692 = vpack.c.bf16 %v664, %v663
      %v693 = vpack.c.bf16 %v666, %v665
      %v694 = vpack.c.bf16 %v668, %v667
      %v695 = vpack.c.bf16 %v670, %v669
      %v696 = vpack.c.bf16 %v672, %v671
      %v697 = vpack.c.bf16 %v674, %v673
      %v698 = vpack.c.bf16 %v676, %v675
      %v699 = vpack.c.bf16 %v678, %v677
      %v700 = vpack.c.bf16 %v680, %v679
      %v701 = vpack.c.bf16 %v682, %v681
      %v702 = vpack.c.bf16 %v684, %v683
      %v703 = vpack.c.bf16 %v686, %v685
      %v704 = vpack.c.bf16 %v688, %v687
      %v721 = vunpack.c.l.b16 %v689
      %v722 = vunpack.c.h.b16 %v689
      %v723 = vunpack.c.l.b16 %v690
      %v724 = vunpack.c.h.b16 %v690
      %v725 = vunpack.c.l.b16 %v691
      %v726 = vunpack.c.h.b16 %v691
      %v727 = vunpack.c.l.b16 %v692
      %v728 = vunpack.c.h.b16 %v692
      %v729 = vunpack.c.l.b16 %v693
      %v730 = vunpack.c.h.b16 %v693
      %v731 = vunpack.c.l.b16 %v694
      %v732 = vunpack.c.h.b16 %v694
      %v733 = vunpack.c.l.b16 %v695
      %v734 = vunpack.c.h.b16 %v695
      %v735 = vunpack.c.l.b16 %v696
      %v736 = vunpack.c.h.b16 %v696
      %v737 = vunpack.c.l.b16 %v697
      %v738 = vunpack.c.h.b16 %v697
      %v739 = vunpack.c.l.b16 %v698
      %v740 = vunpack.c.h.b16 %v698
      %v741 = vunpack.c.l.b16 %v699
      %v742 = vunpack.c.h.b16 %v699
      %v743 = vunpack.c.l.b16 %v700
      %v744 = vunpack.c.h.b16 %v700
      %v745 = vunpack.c.l.b16 %v701
      %v746 = vunpack.c.h.b16 %v701
      %v747 = vunpack.c.l.b16 %v702
      %v748 = vunpack.c.h.b16 %v702
      %v749 = vunpack.c.l.b16 %v703
      %v750 = vunpack.c.h.b16 %v703
      %v751 = vunpack.c.l.b16 %v704
      %v752 = vunpack.c.h.b16 %v704
      %v753 = vpack.c.b16 %v721, %v721
      %v754 = vpack.c.b16 %v722, %v722
      %v755 = vpack.c.b16 %v723, %v723
      %v756 = vpack.c.b16 %v724, %v724
      %v757 = vpack.c.b16 %v725, %v725
      %v758 = vpack.c.b16 %v726, %v726
      %v759 = vpack.c.b16 %v727, %v727
      %v760 = vpack.c.b16 %v728, %v728
      %v761 = vpack.c.b16 %v729, %v729
      %v762 = vpack.c.b16 %v730, %v730
      %v763 = vpack.c.b16 %v731, %v731
      %v764 = vpack.c.b16 %v732, %v732
      %v765 = vpack.c.b16 %v733, %v733
      %v766 = vpack.c.b16 %v734, %v734
      %v767 = vpack.c.b16 %v735, %v735
      %v768 = vpack.c.b16 %v736, %v736
      %v769 = vpack.c.b16 %v737, %v737
      %v770 = vpack.c.b16 %v738, %v738
      %v771 = vpack.c.b16 %v739, %v739
      %v772 = vpack.c.b16 %v740, %v740
      %v773 = vpack.c.b16 %v741, %v741
      %v774 = vpack.c.b16 %v742, %v742
      %v775 = vpack.c.b16 %v743, %v743
      %v776 = vpack.c.b16 %v744, %v744
      %v777 = vpack.c.b16 %v745, %v745
      %v778 = vpack.c.b16 %v746, %v746
      %v779 = vpack.c.b16 %v747, %v747
      %v780 = vpack.c.b16 %v748, %v748
      %v781 = vpack.c.b16 %v749, %v749
      %v782 = vpack.c.b16 %v750, %v750
      %v783 = vpack.c.b16 %v751, %v751
      %v784 = vpack.c.b16 %v752, %v752
      %817 = vst [vmem:[#allocation8] sm:$0xf] %v753
      %818 = vst [vmem:[#allocation8 + $0x4] sm:$0xf] %v754
      %819 = vst [vmem:[#allocation8 + $0x8] sm:$0xf] %v755
      %820 = vst [vmem:[#allocation8 + $0xc] sm:$0xf] %v756
      %821 = vst [vmem:[#allocation8 + $0x10] sm:$0xf] %v757
      %822 = vst [vmem:[#allocation8 + $0x14] sm:$0xf] %v758
      %823 = vst [vmem:[#allocation8 + $0x18] sm:$0xf] %v759
      %824 = vst [vmem:[#allocation8 + $0x1c] sm:$0xf] %v760
      %825 = vst [vmem:[#allocation8 + $0x20] sm:$0xf] %v761
      %826 = vst [vmem:[#allocation8 + $0x24] sm:$0xf] %v762
      %827 = vst [vmem:[#allocation8 + $0x28] sm:$0xf] %v763
      %828 = vst [vmem:[#allocation8 + $0x2c] sm:$0xf] %v764
      %829 = vst [vmem:[#allocation8 + $0x30] sm:$0xf] %v765
      %830 = vst [vmem:[#allocation8 + $0x34] sm:$0xf] %v766
      %831 = vst [vmem:[#allocation8 + $0x38] sm:$0xf] %v767
      %832 = vst [vmem:[#allocation8 + $0x3c] sm:$0xf] %v768
      %833 = vst [vmem:[#allocation8 + $0x40] sm:$0xf] %v769
      %834 = vst [vmem:[#allocation8 + $0x44] sm:$0xf] %v770
      %835 = vst [vmem:[#allocation8 + $0x48] sm:$0xf] %v771
      %836 = vst [vmem:[#allocation8 + $0x4c] sm:$0xf] %v772
      %837 = vst [vmem:[#allocation8 + $0x50] sm:$0xf] %v773
      %838 = vst [vmem:[#allocation8 + $0x54] sm:$0xf] %v774
      %839 = vst [vmem:[#allocation8 + $0x58] sm:$0xf] %v775
      %840 = vst [vmem:[#allocation8 + $0x5c] sm:$0xf] %v776
      %841 = vst [vmem:[#allocation8 + $0x60] sm:$0xf] %v777
      %842 = vst [vmem:[#allocation8 + $0x64] sm:$0xf] %v778
      %843 = vst [vmem:[#allocation8 + $0x68] sm:$0xf] %v779
      %844 = vst [vmem:[#allocation8 + $0x6c] sm:$0xf] %v780
      %845 = vst [vmem:[#allocation8 + $0x70] sm:$0xf] %v781
      %846 = vst [vmem:[#allocation8 + $0x74] sm:$0xf] %v782
      %847 = vst [vmem:[#allocation8 + $0x78] sm:$0xf] %v783
      %848 = vst [vmem:[#allocation8 + $0x7c] sm:$0xf] %v784
    $region25: #{tpu_custom_call.1} parent=1 // pred_fallthru
      _
    // Predicated region
    $region26: #{tpu_custom_call.1} parent=1 // pred_check
      _
    $region27: #{tpu_custom_call.1} parent=1 // pred_check_branch
      %850 = sbr.rel (0) target = $region29
    $region28: #{tpu_custom_call.1} parent=1 // pred_region
      %s852 = ssub.s32 2048, 2048
      %853 = vsyncadd [#allocation5], %s852
      %s854 = sshll.u32 [#allocation8], 4
      %s855 = int_to_ptr.vmem [resolvable:$true] %s854
      %860 = dma.vmem_to_hbm [thread:$0]  %s855, 2048, %s2, [#allocation5], 64, 64, 4
    $region29: #{tpu_custom_call.1} parent=1 // pred_fallthru
      _
    // Predicated region
    $region30: #{tpu_custom_call.1} parent=1 // pred_check
      _
    $region31: #{tpu_custom_call.1} parent=1 // pred_check_branch
      %862 = sbr.rel (0) target = $region33
    $region32: #{tpu_custom_call.1} parent=1 // pred_region
      %863 = dma.done [#allocation5], 2048
    $region33: #{tpu_custom_call.1} parent=1 // pred_fallthru
      _
    %864 = vsyncpa [#allocation4], 1
    %865 = vsyncpa [#allocation7], 1
    %866 = vsyncpa [#allocation5], 1

</llo_original>
